<compile_context>
chip_gen: v7x
topology: tpu7x:2x2x1
jax: 0.10.0
libtpu: 0.0.40
codegen_flags: <defaults>
</compile_context>

<pallas_src>
import functools

import jax
import jax.numpy as jnp
from jax.experimental import pallas as pl
from jax.experimental.pallas import tpu as pltpu

EPS = 1e-5


def _mish(x):
    # Mish(x) = x * tanh(softplus(x)); PyTorch softplus threshold = 20.
    # One-exp exact rewrite: tanh(log(1+t)) = ((1+t)^2 - 1) / ((1+t)^2 + 1), t = e^x.
    t = jnp.exp(jnp.minimum(x, 20.0))
    s = (1.0 + t) * (1.0 + t)
    tsp = (s - 1.0) / (s + 1.0)
    # For x > 20: softplus(x) = x and tanh(x) == 1.0 in float32.
    return x * jnp.where(x > 20.0, 1.0, tsp)


def baseblock_kernel(p_ref, w_ref, g_ref, b_ref, out_ref):
    """Fused im2col-conv + train-mode BatchNorm + Mish.

    p_ref:   (N, K, P)    f32  im2col patches, K = KH*KW*Cin, P = Ho*Wo (lanes)
    w_ref:   (Cout, K)    f32  packed conv weights
    g_ref:   (Cout, 1)    f32  BN gamma
    b_ref:   (Cout, 1)    f32  BN beta
    out_ref: (N, Cout, P) f32  NCHW-flat output
    """
    n_batch, _, n_pix = p_ref.shape
    w = w_ref[...]

    # Convolution: one MXU contraction per batch element, lane-dense output.
    ys = [jnp.dot(w, p_ref[n], preferred_element_type=jnp.float32)
          for n in range(n_batch)]                                   # each (Cout, P)

    # BatchNorm (train mode): biased batch statistics over (N, Ho*Wo) per channel.
    count = jnp.float32(n_batch * n_pix)
    mean = sum(jnp.sum(y, axis=1, keepdims=True) for y in ys) / count          # (Cout, 1)
    var = sum(jnp.sum((y - mean) ** 2, axis=1, keepdims=True) for y in ys) / count
    scale = jax.lax.rsqrt(var + EPS) * g_ref[...]                              # (Cout, 1)
    shift = b_ref[...] - mean * scale

    for n in range(n_batch):
        out_ref[n] = _mish(ys[n] * scale + shift).astype(out_ref.dtype)


@functools.partial(jax.jit, static_argnames=("stride", "padding"))
def baseblock_pallas(x_nchw, w_oihw, gamma, beta, *, stride=1, padding=0):
    """BaseBlock forward: conv(no bias) -> BN(batch stats) -> Mish, NCHW in/out."""
    N, Cin, H, W = x_nchw.shape
    Cout, _, KH, KW = w_oihw.shape

    x = x_nchw.astype(jnp.float32)
    if padding:
        x = jnp.pad(x, ((0, 0), (0, 0), (padding, padding), (padding, padding)))
    Hp, Wp = H + 2 * padding, W + 2 * padding
    Ho = (Hp - KH) // stride + 1
    Wo = (Wp - KW) // stride + 1

    # im2col (layout plumbing in the wrapper):
    # patches[n, (dy*KW+dx)*Cin + ci, i*Wo + j] = x[n, ci, i*stride+dy, j*stride+dx]
    taps = [x[:, :, dy:dy + stride * (Ho - 1) + 1:stride,
                   dx:dx + stride * (Wo - 1) + 1:stride]
            for dy in range(KH) for dx in range(KW)]                  # (N, Cin, Ho, Wo)
    patches = jnp.concatenate(taps, axis=1).reshape(N, KH * KW * Cin, Ho * Wo)

    # Pack weights (Cout, Cin, KH, KW) -> (Cout, KH*KW*Cin), matching tap order above.
    w_mat = jnp.transpose(w_oihw.astype(jnp.float32), (0, 2, 3, 1)).reshape(
        Cout, KH * KW * Cin)
    g = gamma.astype(jnp.float32).reshape(Cout, 1)
    b = beta.astype(jnp.float32).reshape(Cout, 1)

    vmem = pl.BlockSpec(memory_space=pltpu.MemorySpace.VMEM)
    out_flat = pl.pallas_call(
        baseblock_kernel,
        out_shape=jax.ShapeDtypeStruct((N, Cout, Ho * Wo), jnp.float32),
        in_specs=[vmem, vmem, vmem, vmem],
        out_specs=vmem,
    )(patches, w_mat, g, b)

    # Kernel output is already NCHW-flat: reshape is free, no transpose needed.
    return out_flat.reshape(N, Cout, Ho, Wo)


# ---------------- pure-JAX reference (PyTorch semantics) ----------------
def reference(x, w_oihw, gamma, beta, *, stride=1, padding=0):
    y = jax.lax.conv_general_dilated(
        x, w_oihw, window_strides=(stride, stride),
        padding=[(padding, padding), (padding, padding)],
        dimension_numbers=("NCHW", "OIHW", "NCHW"))
    mean = jnp.mean(y, axis=(0, 2, 3), keepdims=True)
    var = jnp.mean((y - mean) ** 2, axis=(0, 2, 3), keepdims=True)
    y = ((y - mean) * jax.lax.rsqrt(var + EPS) * gamma.reshape(1, -1, 1, 1)
         + beta.reshape(1, -1, 1, 1))
    sp = jnp.where(y > 20.0, y, jnp.log1p(jnp.exp(jnp.minimum(y, 20.0))))
    return y * jnp.tanh(sp)


if __name__ == "__main__":
    # Small shapes consistent with the module defaults:
    # BaseBlock(input=4, output=8), kernel=3, stride=1, padding=0, batch=2, 16x16.
    N, Cin, Cout, H, W = 2, 4, 8, 16, 16

    key = jax.random.PRNGKey(0)
    kx, kw, kg, kb = jax.random.split(key, 4)
    x = jax.random.normal(kx, (N, Cin, H, W), dtype=jnp.float32)
    w = jax.random.normal(kw, (Cout, Cin, 3, 3), dtype=jnp.float32) * 0.2
    gamma = 1.0 + 0.1 * jax.random.normal(kg, (Cout,), dtype=jnp.float32)
    beta = 0.1 * jax.random.normal(kb, (Cout,), dtype=jnp.float32)

    out = jax.block_until_ready(baseblock_pallas(x, w, gamma, beta))
    ref = jax.block_until_ready(reference(x, w, gamma, beta))

    assert out.shape == (N, Cout, H - 2, W - 2), out.shape
    max_err = float(jnp.max(jnp.abs(out - ref)))
    assert jnp.allclose(out, ref, atol=5e-4, rtol=5e-4), max_err

    print("KERNEL_OK")
</pallas_src>

<mosaic_0001>
module attributes {stable_mosaic.version = 11 : i64} {
  func.func @baseblock_kernel(%arg0: memref<2x36x196xf32, #tpu.memory_space<vmem>>, %arg1: memref<8x36xf32, #tpu.memory_space<vmem>>, %arg2: memref<8x1xf32, #tpu.memory_space<vmem>>, %arg3: memref<8x1xf32, #tpu.memory_space<vmem>>, %arg4: memref<2x8x196xf32, #tpu.memory_space<vmem>>) attributes {dimension_semantics = [], scalar_prefetch = 0 : i64, scratch_operands = 0 : i64, tpu.core_type = #tpu.core_type<tc>} {
    %c0 = arith.constant 0 : index
    %c0_0 = arith.constant 0 : index
    %0 = vector.load %arg1[%c0, %c0_0] : memref<8x36xf32, #tpu.memory_space<vmem>>, vector<8x36xf32>
    %c0_1 = arith.constant 0 : index
    %c0_2 = arith.constant 0 : index
    %c0_3 = arith.constant 0 : index
    %1 = vector.load %arg0[%c0_1, %c0_2, %c0_3] : memref<2x36x196xf32, #tpu.memory_space<vmem>>, vector<1x36x196xf32>
    %2 = vector.shape_cast %1 : vector<1x36x196xf32> to vector<36x196xf32>
    %cst = arith.constant dense<0.000000e+00> : vector<8x196xf32>
    %3 = tpu.matmul %0, %2, %cst {dimension_numbers = #tpu.dot_dimension_numbers<[1], [0], [0], [1], [0, 0, 1, 1], [], []>} : vector<8x36xf32>, vector<36x196xf32>, vector<8x196xf32> -> vector<8x196xf32>
    %c1 = arith.constant 1 : index
    %c0_4 = arith.constant 0 : index
    %c0_5 = arith.constant 0 : index
    %4 = vector.load %arg0[%c1, %c0_4, %c0_5] : memref<2x36x196xf32, #tpu.memory_space<vmem>>, vector<1x36x196xf32>
    %5 = vector.shape_cast %4 : vector<1x36x196xf32> to vector<36x196xf32>
    %cst_6 = arith.constant dense<0.000000e+00> : vector<8x196xf32>
    %6 = tpu.matmul %0, %5, %cst_6 {dimension_numbers = #tpu.dot_dimension_numbers<[1], [0], [0], [1], [0, 0, 1, 1], [], []>} : vector<8x36xf32>, vector<36x196xf32>, vector<8x196xf32> -> vector<8x196xf32>
    %cst_7 = arith.constant dense<0.000000e+00> : vector<8xf32>
    %7 = vector.multi_reduction <add>, %3, %cst_7 [1] : vector<8x196xf32> to vector<8xf32>
    %8 = vector.shape_cast %7 : vector<8xf32> to vector<8x1xf32>
    %cst_8 = arith.constant 0.000000e+00 : f32
    %9 = vector.broadcast %cst_8 : f32 to vector<8x1xf32>
    %10 = arith.addf %9, %8 : vector<8x1xf32>
    %cst_9 = arith.constant dense<0.000000e+00> : vector<8xf32>
    %11 = vector.multi_reduction <add>, %6, %cst_9 [1] : vector<8x196xf32> to vector<8xf32>
    %12 = vector.shape_cast %11 : vector<8xf32> to vector<8x1xf32>
    %13 = arith.addf %10, %12 : vector<8x1xf32>
    %cst_10 = arith.constant 3.920000e+02 : f32
    %14 = vector.broadcast %cst_10 : f32 to vector<8x1xf32>
    %15 = arith.divf %13, %14 : vector<8x1xf32>
    %16 = vector.broadcast %15 : vector<8x1xf32> to vector<8x196xf32>
    %17 = arith.subf %3, %16 : vector<8x196xf32>
    %18 = arith.mulf %17, %17 : vector<8x196xf32>
    %cst_11 = arith.constant dense<0.000000e+00> : vector<8xf32>
    %19 = vector.multi_reduction <add>, %18, %cst_11 [1] : vector<8x196xf32> to vector<8xf32>
    %20 = vector.shape_cast %19 : vector<8xf32> to vector<8x1xf32>
    %cst_12 = arith.constant 0.000000e+00 : f32
    %21 = vector.broadcast %cst_12 : f32 to vector<8x1xf32>
    %22 = arith.addf %21, %20 : vector<8x1xf32>
    %23 = vector.broadcast %15 : vector<8x1xf32> to vector<8x196xf32>
    %24 = arith.subf %6, %23 : vector<8x196xf32>
    %25 = arith.mulf %24, %24 : vector<8x196xf32>
    %cst_13 = arith.constant dense<0.000000e+00> : vector<8xf32>
    %26 = vector.multi_reduction <add>, %25, %cst_13 [1] : vector<8x196xf32> to vector<8xf32>
    %27 = vector.shape_cast %26 : vector<8xf32> to vector<8x1xf32>
    %28 = arith.addf %22, %27 : vector<8x1xf32>
    %cst_14 = arith.constant 3.920000e+02 : f32
    %29 = vector.broadcast %cst_14 : f32 to vector<8x1xf32>
    %30 = arith.divf %28, %29 : vector<8x1xf32>
    %cst_15 = arith.constant 9.99999974E-6 : f32
    %31 = vector.broadcast %cst_15 : f32 to vector<8x1xf32>
    %32 = arith.addf %30, %31 : vector<8x1xf32>
    %33 = math.rsqrt %32 : vector<8x1xf32>
    %c0_16 = arith.constant 0 : index
    %c0_17 = arith.constant 0 : index
    %34 = vector.load %arg2[%c0_16, %c0_17] : memref<8x1xf32, #tpu.memory_space<vmem>>, vector<8x1xf32>
    %35 = arith.mulf %33, %34 : vector<8x1xf32>
    %c0_18 = arith.constant 0 : index
    %c0_19 = arith.constant 0 : index
    %36 = vector.load %arg3[%c0_18, %c0_19] : memref<8x1xf32, #tpu.memory_space<vmem>>, vector<8x1xf32>
    %37 = arith.mulf %15, %35 : vector<8x1xf32>
    %38 = arith.subf %36, %37 : vector<8x1xf32>
    %39 = vector.broadcast %35 : vector<8x1xf32> to vector<8x196xf32>
    %40 = arith.mulf %3, %39 : vector<8x196xf32>
    %41 = vector.broadcast %38 : vector<8x1xf32> to vector<8x196xf32>
    %42 = arith.addf %40, %41 : vector<8x196xf32>
    %cst_20 = arith.constant 2.000000e+01 : f32
    %43 = vector.broadcast %cst_20 : f32 to vector<8x196xf32>
    %44 = arith.minimumf %42, %43 : vector<8x196xf32>
    %45 = math.exp %44 : vector<8x196xf32>
    %cst_21 = arith.constant 1.000000e+00 : f32
    %46 = vector.broadcast %cst_21 : f32 to vector<8x196xf32>
    %47 = arith.addf %46, %45 : vector<8x196xf32>
    %cst_22 = arith.constant 1.000000e+00 : f32
    %48 = vector.broadcast %cst_22 : f32 to vector<8x196xf32>
    %49 = arith.addf %48, %45 : vector<8x196xf32>
    %50 = arith.mulf %47, %49 : vector<8x196xf32>
    %cst_23 = arith.constant 1.000000e+00 : f32
    %51 = vector.broadcast %cst_23 : f32 to vector<8x196xf32>
    %52 = arith.subf %50, %51 : vector<8x196xf32>
    %cst_24 = arith.constant 1.000000e+00 : f32
    %53 = vector.broadcast %cst_24 : f32 to vector<8x196xf32>
    %54 = arith.addf %50, %53 : vector<8x196xf32>
    %55 = arith.divf %52, %54 : vector<8x196xf32>
    %cst_25 = arith.constant 2.000000e+01 : f32
    %56 = vector.broadcast %cst_25 : f32 to vector<8x196xf32>
    %57 = arith.cmpf ogt, %42, %56 : vector<8x196xf32>
    %cst_26 = arith.constant 1.000000e+00 : f32
    %58 = vector.broadcast %cst_26 : f32 to vector<8x196xf32>
    %59 = arith.select %57, %58, %55 : vector<8x196xi1>, vector<8x196xf32>
    %60 = arith.mulf %42, %59 : vector<8x196xf32>
    %c0_27 = arith.constant 0 : index
    %c0_28 = arith.constant 0 : index
    %c0_29 = arith.constant 0 : index
    %61 = vector.load %arg4[%c0_27, %c0_28, %c0_29] : memref<2x8x196xf32, #tpu.memory_space<vmem>>, vector<1x8x196xf32>
    %62 = vector.shape_cast %61 : vector<1x8x196xf32> to vector<8x196xf32>
    %63 = vector.shape_cast %60 : vector<8x196xf32> to vector<1x8x196xf32>
    tpu.vector_store %arg4[%c0_27, %c0_28, %c0_29], %63 {strides = array<i32>} : memref<2x8x196xf32, #tpu.memory_space<vmem>>, vector<1x8x196xf32>,
    %64 = vector.broadcast %35 : vector<8x1xf32> to vector<8x196xf32>
    %65 = arith.mulf %6, %64 : vector<8x196xf32>
    %66 = vector.broadcast %38 : vector<8x1xf32> to vector<8x196xf32>
    %67 = arith.addf %65, %66 : vector<8x196xf32>
    %cst_30 = arith.constant 2.000000e+01 : f32
    %68 = vector.broadcast %cst_30 : f32 to vector<8x196xf32>
    %69 = arith.minimumf %67, %68 : vector<8x196xf32>
    %70 = math.exp %69 : vector<8x196xf32>
    %cst_31 = arith.constant 1.000000e+00 : f32
    %71 = vector.broadcast %cst_31 : f32 to vector<8x196xf32>
    %72 = arith.addf %71, %70 : vector<8x196xf32>
    %cst_32 = arith.constant 1.000000e+00 : f32
    %73 = vector.broadcast %cst_32 : f32 to vector<8x196xf32>
    %74 = arith.addf %73, %70 : vector<8x196xf32>
    %75 = arith.mulf %72, %74 : vector<8x196xf32>
    %cst_33 = arith.constant 1.000000e+00 : f32
    %76 = vector.broadcast %cst_33 : f32 to vector<8x196xf32>
    %77 = arith.subf %75, %76 : vector<8x196xf32>
    %cst_34 = arith.constant 1.000000e+00 : f32
    %78 = vector.broadcast %cst_34 : f32 to vector<8x196xf32>
    %79 = arith.addf %75, %78 : vector<8x196xf32>
    %80 = arith.divf %77, %79 : vector<8x196xf32>
    %cst_35 = arith.constant 2.000000e+01 : f32
    %81 = vector.broadcast %cst_35 : f32 to vector<8x196xf32>
    %82 = arith.cmpf ogt, %67, %81 : vector<8x196xf32>
    %cst_36 = arith.constant 1.000000e+00 : f32
    %83 = vector.broadcast %cst_36 : f32 to vector<8x196xf32>
    %84 = arith.select %82, %83, %80 : vector<8x196xi1>, vector<8x196xf32>
    %85 = arith.mulf %67, %84 : vector<8x196xf32>
    %c1_37 = arith.constant 1 : index
    %c0_38 = arith.constant 0 : index
    %c0_39 = arith.constant 0 : index
    %86 = vector.load %arg4[%c1_37, %c0_38, %c0_39] : memref<2x8x196xf32, #tpu.memory_space<vmem>>, vector<1x8x196xf32>
    %87 = vector.shape_cast %86 : vector<1x8x196xf32> to vector<8x196xf32>
    %88 = vector.shape_cast %85 : vector<8x196xf32> to vector<1x8x196xf32>
    tpu.vector_store %arg4[%c1_37, %c0_38, %c0_39], %88 {strides = array<i32>} : memref<2x8x196xf32, #tpu.memory_space<vmem>>, vector<1x8x196xf32>,
    return
  }
}

</mosaic_0001>

<llo_original>
// kernel: baseblock_pallas.1
$region0: #{baseblock_pallas.1}
  #allocation0 [shape = 'u32[]', space=smem, size = 0x4, offset = 0x4, fixed_abs, tag = 'smem constant byte address 0x4 - core index']
  #allocation1 [shape = 'u32[144,128]{1,0:T(1,128)}', space=vmem, size = 0x12000, scoped, tag = 'internal scratch']
  %s0 = inlined_call_operand.vmem [shape: f32[2,36,196], index: 0, kind: input, shape index: {}]
  %s1 = inlined_call_operand.vmem [shape: f32[8,36], index: 1, kind: input, shape index: {}]
  %s2 = inlined_call_operand.vmem [shape: f32[8,1], index: 2, kind: input, shape index: {}]
  %s3 = inlined_call_operand.vmem [shape: f32[8,1], index: 3, kind: input, shape index: {}]
  %s4 = inlined_call_operand.vmem [shape: f32[2,8,196], index: 4, kind: output, shape index: {}]
  %s5 = sld [smem:[#allocation0]]
  $region26: #{baseblock_pallas.1} parent=0
    _
  %s7 = ssub.s32 1, %s5
  %s8 = scalar_select 0, %s7, %s5
  // Predicated region
  $region2: #{baseblock_pallas.1} parent=0 // pred_check
    _
  $region3: #{baseblock_pallas.1} parent=0 // pred_check_branch
    %10 = sbr.rel (0) target = $region5
  $region4: #{baseblock_pallas.1} parent=0 // pred_region
    _
  $region5: #{baseblock_pallas.1} parent=0 // pred_fallthru
    _
  // Predicated region
  $region6: #{baseblock_pallas.1} parent=0 // pred_check
    _
  $region7: #{baseblock_pallas.1} parent=0 // pred_check_branch
    %12 = sbr.rel (0) target = $region9
  $region8: #{baseblock_pallas.1} parent=0 // pred_region
    _
  $region9: #{baseblock_pallas.1} parent=0 // pred_fallthru
    _
  // Predicated region
  $region10: #{baseblock_pallas.1} parent=0 // pred_check
    _
  $region11: #{baseblock_pallas.1} parent=0 // pred_check_branch
    %14 = sbr.rel (0) target = $region13
  $region12: #{baseblock_pallas.1} parent=0 // pred_region
    _
  $region13: #{baseblock_pallas.1} parent=0 // pred_fallthru
    _
  // Predicated region
  $region14: #{baseblock_pallas.1} parent=0 // pred_check
    _
  $region15: #{baseblock_pallas.1} parent=0 // pred_check_branch
    %16 = sbr.rel (0) target = $region17
  $region16: #{baseblock_pallas.1} parent=0 // pred_region
    _
  $region17: #{baseblock_pallas.1} parent=0 // pred_fallthru
    _
  %v17 = vld [vmem:[%s1] sm:$0xff]
  %v18 = vld [vmem:[%s0] sm:$0xff]
  %v19 = vld [vmem:[%s0 + $0x8] sm:$0xff]
  %v20 = vld [vmem:[%s0 + $0x10] sm:$0xff]
  %v21 = vld [vmem:[%s0 + $0x18] sm:$0xff]
  %v22 = vld [vmem:[%s0 + $0x20] sm:$0xff]
  %v23 = vld [vmem:[%s0 + $0x28] sm:$0xff]
  %v24 = vld [vmem:[%s0 + $0x30] sm:$0xff]
  %v25 = vld [vmem:[%s0 + $0x38] sm:$0xff]
  %v26 = vld [vmem:[%s0 + $0x40] sm:$0xf]
  %v27 = vld [vmem:[%s0 + $0x48] sm:$0xf]
  %vm28 = vcmask 293888
  %v30 = vsel %vm28, %v17, 0
  %vm32 = vcmask 1043456
  %v34 = vsel %vm32, %v26, 0
  %v37 = vsel %vm32, %v27, 0
  %39 = vmatprep.subr.mxu0 %v19
  %40 = vmatpush1.msra.mxu0 %v18
  %41 = vmatprep.subr.mxu0 %v21
  %42 = vmatpush1.msra.mxu0 %v20
  %43 = vmatprep.subr.mxu0 %v23
  %44 = vmatpush1.msra.mxu0 %v22
  %45 = vmatprep.subr.mxu0 %v25
  %46 = vmatpush1.msra.mxu0 %v24
  %47 = vmatprep.subr.mxu0 %v37
  %48 = vmatpush1.msra.mxu0 %v34
  %49 = vmatprep.subr.mxu0 0.0
  %50 = vmatpush1.msra.mxu0 0.0
  %51 = vmatprep.subr.mxu0 0.0
  %52 = vmatpush1.msra.mxu0 0.0
  %53 = vmatprep.subr.mxu0 0.0
  %54 = vmatpush1.msra.mxu0 0.0
  %55 = vmatprep.subr.mxu0 0.0
  %56 = vmatpush1.msra.mxu0 0.0
  %57 = vmatprep.subr.mxu0 0.0
  %58 = vmatpush1.msra.mxu0 0.0
  %59 = vmatprep.subr.mxu0 0.0
  %60 = vmatpush1.msra.mxu0 0.0
  %61 = vmatprep.subr.mxu0 0.0
  %62 = vmatpush1.msra.mxu0 0.0
  %63 = vmatprep.subr.mxu0 0.0
  %64 = vmatpush1.msra.mxu0 0.0
  %65 = vmatprep.subr.mxu0 0.0
  %66 = vmatpush1.msra.mxu0 0.0
  %67 = vmatprep.subr.mxu0 0.0
  %68 = vmatpush1.msra.mxu0 0.0
  %69 = vmatprep.subr.mxu0 0.0
  %70 = vmatpush1.msra.mxu0 0.0
  %71 = vmatprep.subr.mxu0 0.0
  %72 = vmatpush1.msra.mxu0 0.0
  %73 = vmatprep.subr.mxu0 0.0
  %74 = vmatpush1.msra.mxu0 0.0
  %75 = vmatprep.subr.mxu0 0.0
  %76 = vmatpush1.msra.mxu0 0.0
  %77 = vmatprep.subr.mxu0 0.0
  %78 = vmatpush1.msra.mxu0 0.0
  %79 = vmatprep.subr.mxu0 0.0
  %80 = vmatpush1.msra.mxu0 0.0
  %81 = vmatprep.subr.mxu0 0.0
  %82 = vmatpush1.msra.mxu0 0.0
  %83 = vmatprep.subr.mxu0 0.0
  %84 = vmatpush1.msra.mxu0 0.0
  %85 = vmatprep.subr.mxu0 0.0
  %86 = vmatpush1.msra.mxu0 0.0
  %87 = vmatprep.subr.mxu0 0.0
  %88 = vmatpush1.msra.mxu0 0.0
  %89 = vmatprep.subr.mxu0 0.0
  %90 = vmatpush1.msra.mxu0 0.0
  %91 = vmatprep.subr.mxu0 0.0
  %92 = vmatpush1.msra.mxu0 0.0
  %93 = vmatprep.subr.mxu0 0.0
  %94 = vmatpush1.msra.mxu0 0.0
  %95 = vmatprep.subr.mxu0 0.0
  %96 = vmatpush1.msra.mxu0 0.0
  %97 = vmatprep.subr.mxu0 0.0
  %98 = vmatpush1.msra.mxu0 0.0
  %99 = vmatprep.subr.mxu0 0.0
  %100 = vmatpush1.msra.mxu0 0.0
  %101 = vmatprep.subr.mxu0 0.0
  %102 = vmatpush1.msra.mxu0 0.0
  %103 = vmatprep.mubr.f32.mxu0 0.0
  %104 = vmatmul.mubr.f32.gmra.mrb[0].mxu0 %v30
  %v105 = vpop.f32.mrb[0].mxu0
  %v106 = vadd.f32 0.0, %v105
  %v107 = vpop.f32.mrb[0].mxu0
  %v108 = vadd.f32 0.0, %v107
  %109 = vdwg.mxu0
  %s110 = scalar_lea.vmem %s0, 80
  %v111 = vld [vmem:[%s110] sm:$0xff]
  %v112 = vld [vmem:[%s110 + $0x8] sm:$0xff]
  %v113 = vld [vmem:[%s110 + $0x10] sm:$0xff]
  %v114 = vld [vmem:[%s110 + $0x18] sm:$0xff]
  %v115 = vld [vmem:[%s110 + $0x20] sm:$0xff]
  %v116 = vld [vmem:[%s110 + $0x28] sm:$0xff]
  %v117 = vld [vmem:[%s110 + $0x30] sm:$0xff]
  %v118 = vld [vmem:[%s110 + $0x38] sm:$0xff]
  %v119 = vld [vmem:[%s110 + $0x40] sm:$0xf]
  %v120 = vld [vmem:[%s110 + $0x48] sm:$0xf]
  %v122 = vsel %vm32, %v119, 0
  %v125 = vsel %vm32, %v120, 0
  %127 = vmatprep.subr.mxu0 %v112
  %128 = vmatpush1.msra.mxu0 %v111
  %129 = vmatprep.subr.mxu0 %v114
  %130 = vmatpush1.msra.mxu0 %v113
  %131 = vmatprep.subr.mxu0 %v116
  %132 = vmatpush1.msra.mxu0 %v115
  %133 = vmatprep.subr.mxu0 %v118
  %134 = vmatpush1.msra.mxu0 %v117
  %135 = vmatprep.subr.mxu0 %v125
  %136 = vmatpush1.msra.mxu0 %v122
  %137 = vmatprep.subr.mxu0 0.0
  %138 = vmatpush1.msra.mxu0 0.0
  %139 = vmatprep.subr.mxu0 0.0
  %140 = vmatpush1.msra.mxu0 0.0
  %141 = vmatprep.subr.mxu0 0.0
  %142 = vmatpush1.msra.mxu0 0.0
  %143 = vmatprep.subr.mxu0 0.0
  %144 = vmatpush1.msra.mxu0 0.0
  %145 = vmatprep.subr.mxu0 0.0
  %146 = vmatpush1.msra.mxu0 0.0
  %147 = vmatprep.subr.mxu0 0.0
  %148 = vmatpush1.msra.mxu0 0.0
  %149 = vmatprep.subr.mxu0 0.0
  %150 = vmatpush1.msra.mxu0 0.0
  %151 = vmatprep.subr.mxu0 0.0
  %152 = vmatpush1.msra.mxu0 0.0
  %153 = vmatprep.subr.mxu0 0.0
  %154 = vmatpush1.msra.mxu0 0.0
  %155 = vmatprep.subr.mxu0 0.0
  %156 = vmatpush1.msra.mxu0 0.0
  %157 = vmatprep.subr.mxu0 0.0
  %158 = vmatpush1.msra.mxu0 0.0
  %159 = vmatprep.subr.mxu0 0.0
  %160 = vmatpush1.msra.mxu0 0.0
  %161 = vmatprep.subr.mxu0 0.0
  %162 = vmatpush1.msra.mxu0 0.0
  %163 = vmatprep.subr.mxu0 0.0
  %164 = vmatpush1.msra.mxu0 0.0
  %165 = vmatprep.subr.mxu0 0.0
  %166 = vmatpush1.msra.mxu0 0.0
  %167 = vmatprep.subr.mxu0 0.0
  %168 = vmatpush1.msra.mxu0 0.0
  %169 = vmatprep.subr.mxu0 0.0
  %170 = vmatpush1.msra.mxu0 0.0
  %171 = vmatprep.subr.mxu0 0.0
  %172 = vmatpush1.msra.mxu0 0.0
  %173 = vmatprep.subr.mxu0 0.0
  %174 = vmatpush1.msra.mxu0 0.0
  %175 = vmatprep.subr.mxu0 0.0
  %176 = vmatpush1.msra.mxu0 0.0
  %177 = vmatprep.subr.mxu0 0.0
  %178 = vmatpush1.msra.mxu0 0.0
  %179 = vmatprep.subr.mxu0 0.0
  %180 = vmatpush1.msra.mxu0 0.0
  %181 = vmatprep.subr.mxu0 0.0
  %182 = vmatpush1.msra.mxu0 0.0
  %183 = vmatprep.subr.mxu0 0.0
  %184 = vmatpush1.msra.mxu0 0.0
  %185 = vmatprep.subr.mxu0 0.0
  %186 = vmatpush1.msra.mxu0 0.0
  %187 = vmatprep.subr.mxu0 0.0
  %188 = vmatpush1.msra.mxu0 0.0
  %189 = vmatprep.subr.mxu0 0.0
  %190 = vmatpush1.msra.mxu0 0.0
  %191 = vmatprep.mubr.f32.mxu0 0.0
  %192 = vmatmul.mubr.f32.gmra.mrb[0].mxu0 %v30
  %v193 = vpop.f32.mrb[0].mxu0
  %v194 = vadd.f32 0.0, %v193
  %v195 = vpop.f32.mrb[0].mxu0
  %v196 = vadd.f32 0.0, %v195
  %197 = vdwg.mxu0
  %vm198 = vcmask 556032
  %v199 = vsel %vm198, %v108, 0.0
  %v200 = vadd.f32 %v106, %v199
  %201 = vadd.xlane.f32.xlu0 %v200
  %v202 = vpop.xlane.xlu0 %201
  %v203 = vadd.f32 %v202, 0.0
  %v204 = vsel %vm198, %v196, 0.0
  %v205 = vadd.f32 %v194, %v204
  %206 = vadd.xlane.f32.xlu0 %v205
  %v207 = vpop.xlane.xlu0 %206
  %v208 = vadd.f32 %v203, %v207
  %v209 = vrcp.pop 392.0
  %v210 = vmul.f32 %v208, %v209
  %v211 = vsub.f32 %v106, %v210
  %v212 = vsub.f32 %v108, %v210
  %v213 = vmul.f32 %v211, %v211
  %v214 = vmul.f32 %v212, %v212
  %v215 = vsel %vm198, %v214, 0.0
  %v216 = vadd.f32 %v213, %v215
  %217 = vadd.xlane.f32.xlu0 %v216
  %v218 = vpop.xlane.xlu0 %217
  %v219 = vadd.f32 %v218, 0.0
  %v220 = vsub.f32 %v194, %v210
  %v221 = vsub.f32 %v196, %v210
  %v222 = vmul.f32 %v220, %v220
  %v223 = vmul.f32 %v221, %v221
  %v224 = vsel %vm198, %v223, 0.0
  %v225 = vadd.f32 %v222, %v224
  %226 = vadd.xlane.f32.xlu0 %v225
  %v227 = vpop.xlane.xlu0 %226
  %v228 = vadd.f32 %v219, %v227
  %v229 = vmul.f32 %v228, %v209
  %v230 = vadd.f32 %v229, 1e-05
  %v231 = vrsqrt.pop %v230
  %v232 = vld [vmem:[%s2] sm:$0xff]
  %v233 = vmul.f32 %v231, %v232
  %v234 = vld [vmem:[%s3] sm:$0xff]
  %v235 = vmul.f32 %v210, %v233
  %v236 = vsub.f32 %v234, %v235
  %238 = vset.pattern.permute.xlu0 0
  %239 = vperm.xlu0 %238, %v233
  %v240 = vpop.permute.xlu0 %239
  %v242 = vmul.f32 %v106, %v240
  %v243 = vmul.f32 %v108, %v240
  %245 = vset.pattern.permute.xlu0 0
  %246 = vperm.xlu0 %245, %v236
  %v247 = vpop.permute.xlu0 %246
  %v249 = vadd.f32 %v242, %v247
  %v250 = vadd.f32 %v243, %v247
  %v251 = vmin.f32 %v249, 20.0
  %v252 = vmin.f32 %v250, 20.0
  %v253 = vmul.f32 %v251, 1.442695
  %v254 = vpow.pop %v253
  %v255 = vmul.f32 %v252, 1.442695
  %v256 = vpow.pop %v255
  %v257 = vadd.f32 %v254, 1.0
  %v258 = vadd.f32 %v256, 1.0
  %v259 = vmul.f32 %v257, %v257
  %v260 = vmul.f32 %v258, %v258
  %v261 = vsub.f32 %v259, 1.0
  %v262 = vsub.f32 %v260, 1.0
  %v263 = vadd.f32 %v259, 1.0
  %v264 = vadd.f32 %v260, 1.0
  %v265 = vrcp.pop %v263
  %v266 = vmul.f32 %v261, %v265
  %v267 = vrcp.pop %v264
  %v268 = vmul.f32 %v262, %v267
  %vm269 = vcmp.gt.f32.partialorder %v249, 20.0
  %vm270 = vcmp.gt.f32.partialorder %v250, 20.0
  %v271 = vsel %vm269, 1.0, %v266
  %v272 = vsel %vm270, 1.0, %v268
  %v273 = vmul.f32 %v249, %v271
  %v274 = vmul.f32 %v250, %v272
  %275 = vst [vmem:[%s4] sm:$0xff] %v273
  %276 = vst.msk [vmem:[%s4 + $0x8] sm:$0xff] %vm198, %v274
  %v277 = vmul.f32 %v194, %v240
  %v278 = vmul.f32 %v196, %v240
  %v279 = vadd.f32 %v277, %v247
  %v280 = vadd.f32 %v278, %v247
  %v281 = vmin.f32 %v279, 20.0
  %v282 = vmin.f32 %v280, 20.0
  %v283 = vmul.f32 %v281, 1.442695
  %v284 = vpow.pop %v283
  %v285 = vmul.f32 %v282, 1.442695
  %v286 = vpow.pop %v285
  %v287 = vadd.f32 %v284, 1.0
  %v288 = vadd.f32 %v286, 1.0
  %v289 = vmul.f32 %v287, %v287
  %v290 = vmul.f32 %v288, %v288
  %v291 = vsub.f32 %v289, 1.0
  %v292 = vsub.f32 %v290, 1.0
  %v293 = vadd.f32 %v289, 1.0
  %v294 = vadd.f32 %v290, 1.0
  %v295 = vrcp.pop %v293
  %v296 = vmul.f32 %v291, %v295
  %v297 = vrcp.pop %v294
  %v298 = vmul.f32 %v292, %v297
  %vm299 = vcmp.gt.f32.partialorder %v279, 20.0
  %vm300 = vcmp.gt.f32.partialorder %v280, 20.0
  %v301 = vsel %vm299, 1.0, %v296
  %v302 = vsel %vm300, 1.0, %v298
  %v303 = vmul.f32 %v279, %v301
  %v304 = vmul.f32 %v280, %v302
  %s305 = scalar_lea.vmem %s4, 16
  %306 = vst [vmem:[%s305] sm:$0xff] %v303
  %307 = vst.msk [vmem:[%s305 + $0x8] sm:$0xff] %vm198, %v304
  // Predicated region
  $region18: #{baseblock_pallas.1} parent=0 // pred_check
    _
  $region19: #{baseblock_pallas.1} parent=0 // pred_check_branch
    %309 = sbr.rel (0) target = $region21
  $region20: #{baseblock_pallas.1} parent=0 // pred_region
    _
  $region21: #{baseblock_pallas.1} parent=0 // pred_fallthru
    _
  // Predicated region
  $region22: #{baseblock_pallas.1} parent=0 // pred_check
    _
  $region23: #{baseblock_pallas.1} parent=0 // pred_check_branch
    %311 = sbr.rel (0) target = $region25
  $region24: #{baseblock_pallas.1} parent=0 // pred_region
    _
  $region25: #{baseblock_pallas.1} parent=0 // pred_fallthru
    _

</llo_original>
